<compile_context>
chip_gen: v5e
topology: v5e:2x2
jax: 0.10.0
libtpu: 0.0.40
codegen_flags: <defaults>
</compile_context>

<pallas_src>
import functools

import jax
import jax.numpy as jnp
from jax.experimental import pallas as pl
from jax.experimental.pallas import tpu as pltpu

LANE = 128
MAX_WIDTH = 8192                    # cap on the lane-dense slab width
TARGET_BLOCK_BYTES = 2 * 1024 * 1024  # ~2 MiB per block: >85% of HBM roofline,
                                      # fits v5e default scoped VMEM with 2x buffering
MIN_PALLAS_BYTES = 1 << 20          # below ~1 MiB, XLA's fused elementwise path wins


def _sublane_min(dtype) -> int:
    """Minimum second-to-last block dim for packed vreg tiling."""
    itemsize = jnp.dtype(dtype).itemsize
    return max(8, 32 // itemsize)   # 8 (32-bit), 16 (16-bit), 32 (8-bit)


def _pick_width(n: int) -> int:
    """Largest multiple of 128 that divides n, capped at MAX_WIDTH (0 if none)."""
    for w in range(MAX_WIDTH, LANE - 1, -LANE):
        if n % w == 0:
            return w
    return 0


def _cutoff_kernel(x_ref, o_ref, *, bottom, top, offset):
    x = x_ref[...]
    dt = x.dtype
    bot = jnp.asarray(bottom, dt)
    tp = jnp.asarray(top, dt)
    off = jnp.asarray(offset, dt)
    # Clamp decisions use the original x (matches the PyTorch masked assigns).
    out = jnp.where(x > tp, tp, jnp.where(x < bot, bot, x + off))
    o_ref[...] = out.astype(o_ref.dtype)


def cutoff_ref(x, bottom: float, top: float):
    """Pure-JAX reference (also the fallback path for tiny / odd-sized inputs)."""
    dt = x.dtype
    bot = jnp.asarray(float(bottom), dt)
    tp = jnp.asarray(float(top), dt)
    off = jnp.asarray((float(bottom) + float(top)) / 2.0, dt)
    out = jnp.where(x > tp, tp, jnp.where(x < bot, bot, x + off))
    return out.astype(dt)


def cutoff(x, bottom: float, top: float, *, force_pallas: bool = False):
    """Apply CutOff forward. x: any-shape float array (e.g. NCHW)."""
    n = x.size
    if n == 0:
        return x

    dtype = x.dtype
    itemsize = jnp.dtype(dtype).itemsize
    width = _pick_width(n)
    big_enough = (n * itemsize >= MIN_PALLAS_BYTES) or force_pallas

    # Fallback: element count not a multiple of 128 (would need pad + slice
    # HBM round trips) or too small to amortize kernel launch. XLA fuses this
    # elementwise chain into a single pass, which is already at roofline.
    if width == 0 or not big_enough:
        return cutoff_ref(x, bottom, top)

    rows = n // width
    smin = _sublane_min(dtype)

    # Row tile sized so one block is ~TARGET_BLOCK_BYTES, rounded to the
    # dtype's packed-sublane multiple. A full-dim row block is always legal.
    row_tile = max(smin, (TARGET_BLOCK_BYTES // (width * itemsize)) // smin * smin)
    if row_tile >= rows:
        row_tile = rows
    grid = (pl.cdiv(rows, row_tile),)

    # Pure metadata reshape (contiguous flatten) -> no extra HBM traffic.
    x2d = x.reshape(rows, width)

    kernel = functools.partial(
        _cutoff_kernel,
        bottom=float(bottom),
        top=float(top),
        offset=(float(bottom) + float(top)) / 2.0,
    )

    out2d = pl.pallas_call(
        kernel,
        out_shape=jax.ShapeDtypeStruct((rows, width), dtype),
        grid_spec=pltpu.PrefetchScalarGridSpec(
            num_scalar_prefetch=0,
            grid=grid,
            in_specs=[pl.BlockSpec((row_tile, width), lambda i: (i, 0))],
            out_specs=pl.BlockSpec((row_tile, width), lambda i: (i, 0)),
        ),
        compiler_params=pltpu.CompilerParams(
            dimension_semantics=("parallel",),
            vmem_limit_bytes=32 * 1024 * 1024,
        ),
    )(x2d)

    return out2d.reshape(x.shape)


# TODO(synk): the module's custom `backward` (a hand-written mask, not the true
# autograd of forward) is out of scope for this forward-pass kernel.


if __name__ == "__main__":
    key = jax.random.PRNGKey(0)
    bottom, top = -0.5, 1.0  # asymmetric so the +offset shift is exercised
    k1, k2 = jax.random.split(key)

    # Small NCHW input consistent with an autoencoder feature map.
    # Force the Pallas path so the kernel itself is exercised and validated.
    x = jax.random.normal(k1, (2, 4, 16, 16), dtype=jnp.float32) * 2.0
    out = jax.block_until_ready(cutoff(x, bottom, top, force_pallas=True))
    ref = cutoff_ref(x, bottom, top)
    assert out.shape == x.shape and out.dtype == x.dtype
    assert jnp.allclose(out, ref, atol=1e-6, rtol=1e-6)

    # Larger f32 input goes through the auto Pallas path (wide 8192-lane slab).
    x_big = jax.random.normal(k2, (2, 8, 128, 128), dtype=jnp.float32) * 2.0
    out_big = jax.block_until_ready(cutoff(x_big, bottom, top))
    assert jnp.allclose(out_big, cutoff_ref(x_big, bottom, top), atol=1e-6, rtol=1e-6)

    # bf16 input exercises the dtype-aware (16-sublane) tiling.
    x_bf = x_big.astype(jnp.bfloat16)
    out_bf = jax.block_until_ready(cutoff(x_bf, bottom, top, force_pallas=True))
    assert out_bf.dtype == jnp.bfloat16
    assert jnp.allclose(
        out_bf.astype(jnp.float32),
        cutoff_ref(x_bf, bottom, top).astype(jnp.float32),
        atol=1e-2, rtol=1e-2,
    )

    print("KERNEL_OK")
</pallas_src>

<mosaic_0001>
module attributes {stable_mosaic.version = 11 : i64} {
  func.func @_cutoff_kernel(%arg0: i32, %arg1: memref<1x2048xf32, #tpu.memory_space<vmem>>, %arg2: memref<1x2048xf32, #tpu.memory_space<vmem>>) attributes {dimension_semantics = [#tpu.dimension_semantics<parallel>], iteration_bounds = array<i64: 1>, scalar_prefetch = 0 : i64, scratch_operands = 0 : i64, tpu.core_type = #tpu.core_type<tc>, window_params = [{transform_indices = @transform_0, window_bounds = array<i64: 1, 2048>}, {transform_indices = @transform_1, window_bounds = array<i64: 1, 2048>}]} {
    %c0 = arith.constant 0 : index
    %c0_0 = arith.constant 0 : index
    %0 = vector.load %arg1[%c0, %c0_0] : memref<1x2048xf32, #tpu.memory_space<vmem>>, vector<1x2048xf32>
    %cst = arith.constant 1.000000e+00 : f32
    %1 = vector.broadcast %cst : f32 to vector<1x2048xf32>
    %2 = arith.cmpf ogt, %0, %1 : vector<1x2048xf32>
    %cst_1 = arith.constant -5.000000e-01 : f32
    %3 = vector.broadcast %cst_1 : f32 to vector<1x2048xf32>
    %4 = arith.cmpf olt, %0, %3 : vector<1x2048xf32>
    %cst_2 = arith.constant 2.500000e-01 : f32
    %5 = vector.broadcast %cst_2 : f32 to vector<1x2048xf32>
    %6 = arith.addf %0, %5 : vector<1x2048xf32>
    %cst_3 = arith.constant -5.000000e-01 : f32
    %7 = vector.broadcast %cst_3 : f32 to vector<1x2048xf32>
    %8 = arith.select %4, %7, %6 : vector<1x2048xi1>, vector<1x2048xf32>
    %cst_4 = arith.constant 1.000000e+00 : f32
    %9 = vector.broadcast %cst_4 : f32 to vector<1x2048xf32>
    %10 = arith.select %2, %9, %8 : vector<1x2048xi1>, vector<1x2048xf32>
    %c0_5 = arith.constant 0 : index
    %c0_6 = arith.constant 0 : index
    %11 = vector.load %arg2[%c0_5, %c0_6] : memref<1x2048xf32, #tpu.memory_space<vmem>>, vector<1x2048xf32>
    tpu.vector_store %arg2[%c0_5, %c0_6], %10 {strides = array<i32>} : memref<1x2048xf32, #tpu.memory_space<vmem>>, vector<1x2048xf32>,
    return
  }
  func.func @transform_0(%arg0: i32) -> (i32, i32) {
    %c0_i32 = arith.constant 0 : i32
    %c0_i32_0 = arith.constant 0 : i32
    return %arg0, %c0_i32 : i32, i32
  }
  func.func @transform_1(%arg0: i32) -> (i32, i32) {
    %c0_i32 = arith.constant 0 : i32
    %c0_i32_0 = arith.constant 0 : i32
    return %arg0, %c0_i32 : i32, i32
  }
}

</mosaic_0001>

<llo_original>
// kernel: tpu_custom_call.1
$region0: #{tpu_custom_call.1}
  #allocation0 [shape = 'u32[]', space=smem, size = 0x4, offset = 0x4, fixed_abs, tag = 'smem constant byte address 0x4 - core index']
  #allocation1 [shape = 'u32[72,128]{1,0:T(1,128)}', space=vmem, size = 0x9000, scoped, tag = 'internal scratch']
  %s0 = inlined_call_operand.hbm [shape: f32[1,2048], index: 0, kind: input, shape index: {}]
  %s1 = inlined_call_operand.hbm [shape: f32[1,2048], index: 1, kind: output, shape index: {}]
  %s2 = sld [smem:[#allocation0]]
  $region18: #{tpu_custom_call.1} parent=0
    _
  %s4 = ssub.s32 1, %s2
  %s5 = scalar_select 0, %s4, %s2
  $region1: #{tpu_custom_call.1} parent=0
    #allocation2 [shape = 'u8[8192]{0}', space=vmem, size = 0x2000, scoped, tag = 'input window, operand 0, single buffered']
    #allocation3 [shape = 's32[1]{0}', space=sflag, size = 0x4, scoped, tag = 'scoped memory for tpu_custom_call.1']
    #allocation4 [shape = 's32[1]{0}', space=sflag, size = 0x4, scoped, tag = 'scoped memory for tpu_custom_call.1']
    #allocation5 [shape = 'u8[8192]{0}', space=vmem, size = 0x2000, scoped, tag = 'output window, operand 0, single buffered']
    %6 = vsyncpa [#allocation3], 0
    %7 = vsyncpa [#allocation4], 0
    // Predicated region
    $region2: #{tpu_custom_call.1} parent=1 // pred_check
      _
    $region3: #{tpu_custom_call.1} parent=1 // pred_check_branch
      %9 = sbr.rel (0) target = $region5
    $region4: #{tpu_custom_call.1} parent=1 // pred_region
      %11 = vsyncadd [#allocation3], 0
      %s13 = sshll.u32 %s0, 4
      %s14 = int_to_ptr.hbm [resolvable:$true] %s13
      %s15 = sshll.u32 [#allocation2], 4
      %s16 = int_to_ptr.vmem [resolvable:$true] %s15
      %18 = dma.hbm_to_vmem [thread:$0]  %s14, 256, %s16, [#allocation3]
    $region5: #{tpu_custom_call.1} parent=1 // pred_fallthru
      _
    // Predicated region
    $region6: #{tpu_custom_call.1} parent=1 // pred_check
      _
    $region7: #{tpu_custom_call.1} parent=1 // pred_check_branch
      %20 = sbr.rel (0) target = $region9
    $region8: #{tpu_custom_call.1} parent=1 // pred_region
      %22 = dma.done [#allocation3], 256
    $region9: #{tpu_custom_call.1} parent=1 // pred_fallthru
      _
    %v23 = vld [vmem:[#allocation2] sm:$0xff]
    %v24 = vld [vmem:[#allocation2 + $0x8] sm:$0xff]
    %vm25 = vcmp.gt.f32.partialorder %v23, 1.0
    %vm26 = vcmp.gt.f32.partialorder %v24, 1.0
    %vm27 = vcmp.lt.f32.partialorder %v23, -0.5
    %vm28 = vcmp.lt.f32.partialorder %v24, -0.5
    %v29 = vadd.f32 %v23, 0.25
    %v30 = vadd.f32 %v24, 0.25
    %v31 = vsel %vm27, -0.5, %v29
    %v32 = vsel %vm28, -0.5, %v30
    %v33 = vsel %vm25, 1.0, %v31
    %v34 = vsel %vm26, 1.0, %v32
    %35 = vst [vmem:[#allocation5] sm:$0xff] %v33
    %36 = vst [vmem:[#allocation5 + $0x8] sm:$0xff] %v34
    // Predicated region
    $region10: #{tpu_custom_call.1} parent=1 // pred_check
      _
    $region11: #{tpu_custom_call.1} parent=1 // pred_check_branch
      %38 = sbr.rel (0) target = $region13
    $region12: #{tpu_custom_call.1} parent=1 // pred_region
      %40 = vsyncadd [#allocation4], 0
      %s42 = sshll.u32 [#allocation5], 4
      %s43 = int_to_ptr.vmem [resolvable:$true] %s42
      %s44 = sshll.u32 %s1, 4
      %s45 = int_to_ptr.hbm [resolvable:$true] %s44
      %47 = dma.vmem_to_hbm [thread:$0]  %s43, 256, %s45, [#allocation4]
    $region13: #{tpu_custom_call.1} parent=1 // pred_fallthru
      _
    // Predicated region
    $region14: #{tpu_custom_call.1} parent=1 // pred_check
      _
    $region15: #{tpu_custom_call.1} parent=1 // pred_check_branch
      %49 = sbr.rel (0) target = $region17
    $region16: #{tpu_custom_call.1} parent=1 // pred_region
      %51 = dma.done [#allocation4], 256
    $region17: #{tpu_custom_call.1} parent=1 // pred_fallthru
      _
    %52 = vsyncpa [#allocation3], 1
    %53 = vsyncpa [#allocation4], 1

</llo_original>
